<compile_context>
chip_gen: v7x
topology: tpu7x:2x2x1
jax: 0.10.0
libtpu: 0.0.40
codegen_flags: <defaults>
</compile_context>

<pallas_src>
from functools import partial

import jax
import jax.numpy as jnp
from jax.experimental import pallas as pl
from jax.experimental.pallas import tpu as pltpu

_SUBLANE = 8     # f32 sublane granularity -> minimum useful M
_LANE = 128      # lane width -> lane-dense last dims
_TK = 512        # K-tile (lanes of x / sublanes of W1) per grid step


def _round_up(n, m):
    return ((n + m - 1) // m) * m


def _k_tiling(d_in):
    """Padded K extent and K-tile size (consistent between prep and call)."""
    if d_in <= _TK:
        dp = max(_round_up(d_in, _LANE), _LANE)
        return dp, dp                 # single K block
    dp = _round_up(d_in, _TK)
    return dp, _TK


# ---------------------------------------------------------------------------
# Pallas kernel: fused 2-layer MLP embedding, K-tiled over the flattened input
# dim.  Per grid step k:
#   x:  [Mp, tk]   (k-th K slice of the fused 2-branch batch)
#   W1: [tk, H1p]  (k-th K slice of the first weight)
# Hidden activations accumulate in a resident f32 scratch; the ReLU + second
# matmul + bias run once on the last K step.
# ---------------------------------------------------------------------------
def _embedding_mlp_kernel(x_ref, w1_ref, b1_ref, w2_ref, b2_ref, o_ref, h_acc):
    k = pl.program_id(0)

    @pl.when(k == 0)
    def _():
        h_acc[...] = jnp.zeros_like(h_acc)

    h_acc[...] += jnp.dot(x_ref[...], w1_ref[...],
                          preferred_element_type=jnp.float32)     # [Mp, H1p]

    @pl.when(k == pl.num_programs(0) - 1)
    def _():
        h = jnp.maximum(h_acc[...] + b1_ref[...], 0.0)            # ReLU
        o = jnp.dot(h, w2_ref[...],
                    preferred_element_type=jnp.float32)           # [Mp, Ep]
        o_ref[...] = (o + b2_ref[...]).astype(o_ref.dtype)


def _mlp_pallas(x, w1p, b1p, w2p, b2p):
    """x: [Mp, Dp] (already padded); weights already padded. Returns [Mp, Ep]."""
    Mp, Dp = x.shape
    H1p = w1p.shape[1]
    Ep = w2p.shape[1]
    _, tk = _k_tiling(Dp)
    nk = Dp // tk

    return pl.pallas_call(
        _embedding_mlp_kernel,
        out_shape=jax.ShapeDtypeStruct((Mp, Ep), jnp.float32),
        grid=(nk,),
        in_specs=[
            pl.BlockSpec((Mp, tk), lambda k: (0, k)),    # K-sliced x
            pl.BlockSpec((tk, H1p), lambda k: (k, 0)),   # K-sliced W1
            pl.BlockSpec((1, H1p), lambda k: (0, 0)),    # resident b1
            pl.BlockSpec((H1p, Ep), lambda k: (0, 0)),   # resident W2
            pl.BlockSpec((1, Ep), lambda k: (0, 0)),     # resident b2
        ],
        out_specs=pl.BlockSpec((Mp, Ep), lambda k: (0, 0)),  # resident output
        scratch_shapes=[pltpu.VMEM((Mp, H1p), jnp.float32)],
        compiler_params=pltpu.CompilerParams(
            dimension_semantics=("arbitrary",),          # K is a reduction
        ),
    )(x, w1p, b1p, w2p, b2p)


# ---------------------------------------------------------------------------
# One-time parameter preparation (outside the per-call jitted path).
# ---------------------------------------------------------------------------
def prepare_params(params):
    """Cast to f32 and pad to TPU-friendly extents ONCE.

    Returns (w1p [Dp, H1p], b1p [1, H1p], w2p [H1p, Ep], b2p [1, Ep]).
    Zero padding is exact: padded hidden cols give ReLU(0+0)=0 and padded W2
    rows are 0, padded K cols of x multiply padded-zero rows of W1.
    """
    w1, b1, w2, b2 = params
    d_in, hidden = w1.shape
    emb = w2.shape[1]
    dp, _ = _k_tiling(d_in)
    h1p = max(_round_up(hidden, _LANE), _LANE)
    ep = max(_round_up(emb, _LANE), _LANE)

    w1p = jnp.pad(w1.astype(jnp.float32), ((0, dp - d_in), (0, h1p - hidden)))
    b1p = jnp.pad(b1.astype(jnp.float32).reshape(1, hidden),
                  ((0, 0), (0, h1p - hidden)))
    w2p = jnp.pad(w2.astype(jnp.float32), ((0, h1p - hidden), (0, ep - emb)))
    b2p = jnp.pad(b2.astype(jnp.float32).reshape(1, emb),
                  ((0, 0), (0, ep - emb)))
    return w1p, b1p, w2p, b2p


def _flatten_pad(xflat, dp, mp):
    m, d = xflat.shape
    pad_m, pad_k = mp - m, dp - d
    if pad_m or pad_k:
        xflat = jnp.pad(xflat, ((0, pad_m), (0, pad_k)))
    return xflat


# ---------------------------------------------------------------------------
# SiameseNet forward: shared embedding net applied to both inputs, with the
# two branches fused along the batch axis into a single pallas_call.
# ---------------------------------------------------------------------------
@partial(jax.jit, static_argnames=("emb_dim",))
def siamese_forward(x1, x2, w1p, b1p, w2p, b2p, emb_dim):
    """Mirrors SiameseNet.forward: returns (embedding(x1), embedding(x2))."""
    B = x1.shape[0]
    Dp = w1p.shape[0]
    x = jnp.concatenate(
        [x1.reshape(B, -1), x2.reshape(B, -1)], axis=0).astype(jnp.float32)
    Mp = max(_round_up(2 * B, _SUBLANE), _SUBLANE)
    x = _flatten_pad(x, Dp, Mp)                       # [Mp, Dp]

    out = _mlp_pallas(x, w1p, b1p, w2p, b2p)          # [Mp, Ep]
    return out[:B, :emb_dim], out[B:2 * B, :emb_dim]


@partial(jax.jit, static_argnames=("emb_dim",))
def get_embedding(x, w1p, b1p, w2p, b2p, emb_dim):
    """Mirrors SiameseNet.get_embedding (single branch)."""
    B = x.shape[0]
    Dp = w1p.shape[0]
    xf = x.reshape(B, -1).astype(jnp.float32)
    Mp = max(_round_up(B, _SUBLANE), _SUBLANE)
    xf = _flatten_pad(xf, Dp, Mp)

    out = _mlp_pallas(xf, w1p, b1p, w2p, b2p)
    return out[:B, :emb_dim]


def init_params(key, d_in, hidden, emb_dim):
    k1, k2 = jax.random.split(key)
    w1 = (jax.random.normal(k1, (d_in, hidden), jnp.float32)
          / jnp.sqrt(jnp.float32(d_in)))
    b1 = jnp.zeros((1, hidden), jnp.float32)
    w2 = (jax.random.normal(k2, (hidden, emb_dim), jnp.float32)
          / jnp.sqrt(jnp.float32(hidden)))
    b2 = jnp.zeros((1, emb_dim), jnp.float32)
    return w1, b1, w2, b2


# TODO(synk): SiameseNet.predict uses torchvision test transforms on a PIL
# image; image preprocessing has no Pallas equivalent and is not implemented.

if __name__ == "__main__":
    # Small shapes consistent with an NCHW image-pair siamese forward.
    B, C, H, W = 2, 4, 16, 16
    D = C * H * W            # 1024  -> two K-tiles of 512
    HIDDEN = 128
    EMB = 32

    key = jax.random.PRNGKey(0)
    kx1, kx2, kp = jax.random.split(key, 3)
    x1 = jax.random.normal(kx1, (B, C, H, W), jnp.float32)
    x2 = jax.random.normal(kx2, (B, C, H, W), jnp.float32)
    params = init_params(kp, D, HIDDEN, EMB)

    # One-time weight prep (cast + pad), outside the per-call path.
    w1p, b1p, w2p, b2p = prepare_params(params)
    jax.block_until_ready((w1p, b1p, w2p, b2p))

    out1, out2 = siamese_forward(x1, x2, w1p, b1p, w2p, b2p, emb_dim=EMB)
    jax.block_until_ready((out1, out2))

    # Sanity check against a pure-JAX reference of the same embedding net.
    def ref_embed(x):
        w1, b1, w2, b2 = params
        xf = x.reshape(x.shape[0], -1)
        h = jnp.maximum(xf @ w1 + b1, 0.0)
        return h @ w2 + b2

    r1, r2 = ref_embed(x1), ref_embed(x2)
    assert out1.shape == (B, EMB) and out2.shape == (B, EMB)
    assert jnp.allclose(out1, r1, atol=1e-4, rtol=1e-4)
    assert jnp.allclose(out2, r2, atol=1e-4, rtol=1e-4)

    emb = get_embedding(x1, w1p, b1p, w2p, b2p, emb_dim=EMB)
    jax.block_until_ready(emb)
    assert emb.shape == (B, EMB)
    assert jnp.allclose(emb, r1, atol=1e-4, rtol=1e-4)

    print("KERNEL_OK")
</pallas_src>

<mosaic_0001>
module attributes {stable_mosaic.version = 11 : i64} {
  func.func @_embedding_mlp_kernel(%arg0: i32, %arg1: memref<8x512xf32, #tpu.memory_space<vmem>>, %arg2: memref<512x128xf32, #tpu.memory_space<vmem>>, %arg3: memref<1x128xf32, #tpu.memory_space<vmem>>, %arg4: memref<128x128xf32, #tpu.memory_space<vmem>>, %arg5: memref<1x128xf32, #tpu.memory_space<vmem>>, %arg6: memref<8x128xf32, #tpu.memory_space<vmem>>, %arg7: memref<8x128xf32, #tpu.memory_space<vmem>>) attributes {dimension_semantics = [#tpu.dimension_semantics<arbitrary>], iteration_bounds = array<i64: 2>, scalar_prefetch = 0 : i64, scratch_operands = 1 : i64, tpu.core_type = #tpu.core_type<tc>, window_params = [{transform_indices = @transform_0, window_bounds = array<i64: 8, 512>}, {transform_indices = @transform_1, window_bounds = array<i64: 512, 128>}, {pipeline_mode = #tpu.pipeline_mode<synchronous>, transform_indices = @transform_2, window_bounds = array<i64: 1, 128>}, {pipeline_mode = #tpu.pipeline_mode<synchronous>, transform_indices = @transform_3, window_bounds = array<i64: 128, 128>}, {pipeline_mode = #tpu.pipeline_mode<synchronous>, transform_indices = @transform_4, window_bounds = array<i64: 1, 128>}, {pipeline_mode = #tpu.pipeline_mode<synchronous>, transform_indices = @transform_5, window_bounds = array<i64: 8, 128>}]} {
    %c0_i32 = arith.constant 0 : i32
    %0 = arith.cmpi eq, %arg0, %c0_i32 : i32
    %1 = arith.extui %0 : i1 to i32
    %c0_i32_0 = arith.constant 0 : i32
    %2 = arith.cmpi ne, %1, %c0_i32_0 : i32
    scf.if %2 {
      %cst_9 = arith.constant 0.000000e+00 : f32
      %12 = vector.broadcast %cst_9 : f32 to vector<8x128xf32>
      %c0_10 = arith.constant 0 : index
      %c0_11 = arith.constant 0 : index
      %13 = vector.load %arg7[%c0_10, %c0_11] : memref<8x128xf32, #tpu.memory_space<vmem>>, vector<8x128xf32>
      tpu.vector_store %arg7[%c0_10, %c0_11], %12 {strides = array<i32>} : memref<8x128xf32, #tpu.memory_space<vmem>>, vector<8x128xf32>,
    } else {
    }
    %c0 = arith.constant 0 : index
    %c0_1 = arith.constant 0 : index
    %3 = vector.load %arg7[%c0, %c0_1] : memref<8x128xf32, #tpu.memory_space<vmem>>, vector<8x128xf32>
    %c0_2 = arith.constant 0 : index
    %c0_3 = arith.constant 0 : index
    %4 = vector.load %arg1[%c0_2, %c0_3] : memref<8x512xf32, #tpu.memory_space<vmem>>, vector<8x512xf32>
    %c0_4 = arith.constant 0 : index
    %c0_5 = arith.constant 0 : index
    %5 = vector.load %arg2[%c0_4, %c0_5] : memref<512x128xf32, #tpu.memory_space<vmem>>, vector<512x128xf32>
    %cst = arith.constant dense<0.000000e+00> : vector<8x128xf32>
    %6 = tpu.matmul %4, %5, %cst {dimension_numbers = #tpu.dot_dimension_numbers<[1], [0], [0], [1], [0, 0, 1, 1], [], []>} : vector<8x512xf32>, vector<512x128xf32>, vector<8x128xf32> -> vector<8x128xf32>
    %7 = arith.addf %3, %6 : vector<8x128xf32>
    %c0_6 = arith.constant 0 : index
    %c0_7 = arith.constant 0 : index
    %8 = vector.load %arg7[%c0_6, %c0_7] : memref<8x128xf32, #tpu.memory_space<vmem>>, vector<8x128xf32>
    tpu.vector_store %arg7[%c0_6, %c0_7], %7 {strides = array<i32>} : memref<8x128xf32, #tpu.memory_space<vmem>>, vector<8x128xf32>,
    %c1_i32 = arith.constant 1 : i32
    %9 = arith.cmpi eq, %arg0, %c1_i32 : i32
    %10 = arith.extui %9 : i1 to i32
    %c0_i32_8 = arith.constant 0 : i32
    %11 = arith.cmpi ne, %10, %c0_i32_8 : i32
    scf.if %11 {
      %c0_9 = arith.constant 0 : index
      %c0_10 = arith.constant 0 : index
      %12 = vector.load %arg7[%c0_9, %c0_10] : memref<8x128xf32, #tpu.memory_space<vmem>>, vector<8x128xf32>
      %c0_11 = arith.constant 0 : index
      %c0_12 = arith.constant 0 : index
      %13 = vector.load %arg3[%c0_11, %c0_12] : memref<1x128xf32, #tpu.memory_space<vmem>>, vector<1x128xf32>
      %14 = vector.broadcast %13 : vector<1x128xf32> to vector<8x128xf32>
      %15 = arith.addf %12, %14 : vector<8x128xf32>
      %cst_13 = arith.constant 0.000000e+00 : f32
      %16 = vector.broadcast %cst_13 : f32 to vector<8x128xf32>
      %17 = arith.maximumf %15, %16 : vector<8x128xf32>
      %c0_14 = arith.constant 0 : index
      %c0_15 = arith.constant 0 : index
      %18 = vector.load %arg4[%c0_14, %c0_15] : memref<128x128xf32, #tpu.memory_space<vmem>>, vector<128x128xf32>
      %cst_16 = arith.constant dense<0.000000e+00> : vector<8x128xf32>
      %19 = tpu.matmul %17, %18, %cst_16 {dimension_numbers = #tpu.dot_dimension_numbers<[1], [0], [0], [1], [0, 0, 1, 1], [], []>} : vector<8x128xf32>, vector<128x128xf32>, vector<8x128xf32> -> vector<8x128xf32>
      %c0_17 = arith.constant 0 : index
      %c0_18 = arith.constant 0 : index
      %20 = vector.load %arg5[%c0_17, %c0_18] : memref<1x128xf32, #tpu.memory_space<vmem>>, vector<1x128xf32>
      %21 = vector.broadcast %20 : vector<1x128xf32> to vector<8x128xf32>
      %22 = arith.addf %19, %21 : vector<8x128xf32>
      %c0_19 = arith.constant 0 : index
      %c0_20 = arith.constant 0 : index
      %23 = vector.load %arg6[%c0_19, %c0_20] : memref<8x128xf32, #tpu.memory_space<vmem>>, vector<8x128xf32>
      tpu.vector_store %arg6[%c0_19, %c0_20], %22 {strides = array<i32>} : memref<8x128xf32, #tpu.memory_space<vmem>>, vector<8x128xf32>,
    } else {
    }
    return
  }
  func.func @transform_0(%arg0: i32) -> (i32, i32) {
    %c0_i32 = arith.constant 0 : i32
    %c0_i32_0 = arith.constant 0 : i32
    return %c0_i32, %arg0 : i32, i32
  }
  func.func @transform_1(%arg0: i32) -> (i32, i32) {
    %c0_i32 = arith.constant 0 : i32
    %c0_i32_0 = arith.constant 0 : i32
    return %arg0, %c0_i32 : i32, i32
  }
  func.func @transform_2(%arg0: i32) -> (i32, i32) {
    %c0_i32 = arith.constant 0 : i32
    %c0_i32_0 = arith.constant 0 : i32
    %c0_i32_1 = arith.constant 0 : i32
    return %c0_i32, %c0_i32_0 : i32, i32
  }
  func.func @transform_3(%arg0: i32) -> (i32, i32) {
    %c0_i32 = arith.constant 0 : i32
    %c0_i32_0 = arith.constant 0 : i32
    %c0_i32_1 = arith.constant 0 : i32
    return %c0_i32, %c0_i32_0 : i32, i32
  }
  func.func @transform_4(%arg0: i32) -> (i32, i32) {
    %c0_i32 = arith.constant 0 : i32
    %c0_i32_0 = arith.constant 0 : i32
    %c0_i32_1 = arith.constant 0 : i32
    return %c0_i32, %c0_i32_0 : i32, i32
  }
  func.func @transform_5(%arg0: i32) -> (i32, i32) {
    %c0_i32 = arith.constant 0 : i32
    %c0_i32_0 = arith.constant 0 : i32
    %c0_i32_1 = arith.constant 0 : i32
    return %c0_i32, %c0_i32_0 : i32, i32
  }
}

</mosaic_0001>

<llo_original>
// kernel: siamese_forward.1
$region0: #{siamese_forward.1}
  #allocation0 [shape = 'u32[]', space=smem, size = 0x4, offset = 0x4, fixed_abs, tag = 'smem constant byte address 0x4 - core index']
  #allocation1 [shape = 'u32[144,128]{1,0:T(1,128)}', space=vmem, size = 0x12000, scoped, tag = 'internal scratch']
  #allocation2 [shape = 'f32[8,128]{1,0:T(8,128)}', space=vmem, size = 0x1000, scoped, tag = 'scratch operand']
  %s0 = inlined_call_operand.vmem [shape: f32[8,1024], index: 0, kind: input, shape index: {}]
  %s1 = inlined_call_operand.hbm [shape: f32[1024,128], index: 1, kind: input, shape index: {}]
  %s2 = inlined_call_operand.vmem [shape: f32[1,128], index: 2, kind: input, shape index: {}]
  %s3 = inlined_call_operand.vmem [shape: f32[128,128], index: 3, kind: input, shape index: {}]
  %s4 = inlined_call_operand.vmem [shape: f32[1,128], index: 4, kind: input, shape index: {}]
  %s5 = inlined_call_operand.vmem [shape: f32[8,128], index: 5, kind: output, shape index: {}]
  %s6 = sld [smem:[#allocation0]]
  $region65: #{siamese_forward.1} parent=0
    _
  %s8 = ssub.s32 1, %s6
  %s9 = scalar_select 0, %s8, %s6
  $region1: #{siamese_forward.1} parent=0
    #allocation3 [shape = 'u8[524288]{0}', space=vmem, size = 0x80000, scoped, tag = 'input window, operand 1']
    #allocation4 [shape = 's32[2]{0}', space=sflag, size = 0x8, scoped, tag = 'scoped memory for siamese_forward.1']
    %10 = vsyncpa [#allocation4], 0
    %s11 = scalar_lea.sflag [#allocation4], 1
    %12 = vsyncpa %s11, 0
    loop: start=0, step=1, limit=4
    $region2: #{siamese_forward.1} parent=1 // loop_pre_header
      _
    $region3: #{siamese_forward.1} parent=1 // loop_header
      %s14 = sphi 0, %s18
      %p15 = scmp.ge.s32.totalorder %s14, 4
      %s24 = sphi 0, %s26
      %s27 = sphi 0, %s24
      %s28 = sphi 0, %s27
      %s44 = sphi 0, %s28
      %s50 = sphi 0, %s52
      %s53 = sphi 0, %s50
      %s54 = sphi 0, %s53
      %s70 = sphi 0, %s54
      %s74 = sphi 0, %s74
      %s76 = sphi 0, %s74
      %s77 = sphi 0, %s76
      %s91 = sphi 0, %s77
      %s95 = sphi 0, %s95
      %s97 = sphi 0, %s95
      %s98 = sphi 0, %s97
      %s112 = sphi 0, %s98
      %s116 = sphi 0, %s116
      %s118 = sphi 0, %s116
      %s119 = sphi 0, %s118
      %s133 = sphi 0, %s119
      %s137 = sphi 0, %s137
      %s139 = sphi 0, %s137
      %s140 = sphi 0, %s139
      %s154 = sphi 0, %s140
    $region4: #{siamese_forward.1} parent=1 // loop_header_branch
      %17 = sbr.rel (%p15) target = $region8
    $region5: #{siamese_forward.1} parent=1 // loop_body
      %s19 = ssub.s32 %s14, 1
      %s20 = ssub.s32 %s14, 2
      %s21 = sadd.s32 %s14, 1
      %s22 = ssub.s32 %s14, %s21
      %p23 = scmp.eq.s32.totalorder %s22, 0
      %s25 = sadd.s32 %s24, 1
      %s26 = scalar_select %p23, %s24, %s25
      %p29 = pneg %p23
      %p30 = scmp.eq.s32.totalorder %s14, 1
      %p31 = por %p29, %p30
      %p32 = scmp.ne.s32.totalorder %s24, %s27
      %p33 = scmp.eq.s32.totalorder %s14, 0
      %p34 = por %p32, %p33
      %p35 = scmp.ne.s32.totalorder %s24, %s27
      %p36 = scmp.eq.s32.totalorder %s19, 1
      %p37 = por %p35, %p36
      %p38 = scmp.ne.s32.totalorder %s27, %s28
      %p39 = scmp.eq.s32.totalorder %s19, 0
      %p40 = por %p38, %p39
      %p41 = scmp.ne.s32.totalorder %s27, %s28
      %p42 = scmp.eq.s32.totalorder %s20, 1
      %p43 = por %p41, %p42
      %p45 = scmp.ne.s32.totalorder %s28, %s44
      %p46 = scmp.eq.s32.totalorder %s20, 0
      %p47 = por %p45, %p46
      %s48 = ssub.s32 %s14, %s21
      %p49 = scmp.eq.s32.totalorder %s48, 0
      %s51 = sadd.s32 %s50, 1
      %s52 = scalar_select %p49, %s50, %s51
      %p55 = pneg %p49
      %p56 = scmp.eq.s32.totalorder %s14, 1
      %p57 = por %p55, %p56
      %p58 = scmp.ne.s32.totalorder %s50, %s53
      %p59 = scmp.eq.s32.totalorder %s14, 0
      %p60 = por %p58, %p59
      %p61 = scmp.ne.s32.totalorder %s50, %s53
      %p62 = scmp.eq.s32.totalorder %s19, 1
      %p63 = por %p61, %p62
      %p64 = scmp.ne.s32.totalorder %s53, %s54
      %p65 = scmp.eq.s32.totalorder %s19, 0
      %p66 = por %p64, %p65
      %p67 = scmp.ne.s32.totalorder %s53, %s54
      %p68 = scmp.eq.s32.totalorder %s20, 1
      %p69 = por %p67, %p68
      %p71 = scmp.ne.s32.totalorder %s54, %s70
      %p72 = scmp.eq.s32.totalorder %s20, 0
      %p73 = por %p71, %p72
      %s75 = sadd.s32 %s74, 1
      %p78 = scmp.eq.s32.totalorder %s14, 1
      %p79 = scmp.ne.s32.totalorder %s74, %s76
      %p80 = scmp.eq.s32.totalorder %s14, 0
      %p81 = por %p79, %p80
      %p82 = scmp.ne.s32.totalorder %s74, %s76
      %p83 = scmp.eq.s32.totalorder %s19, 1
      %p84 = por %p82, %p83
      %p85 = scmp.ne.s32.totalorder %s76, %s77
      %p86 = scmp.eq.s32.totalorder %s19, 0
      %p87 = por %p85, %p86
      %p88 = scmp.ne.s32.totalorder %s76, %s77
      %p89 = scmp.eq.s32.totalorder %s20, 1
      %p90 = por %p88, %p89
      %p92 = scmp.ne.s32.totalorder %s77, %s91
      %p93 = scmp.eq.s32.totalorder %s20, 0
      %p94 = por %p92, %p93
      %s96 = sadd.s32 %s95, 1
      %p99 = scmp.eq.s32.totalorder %s14, 1
      %p100 = scmp.ne.s32.totalorder %s95, %s97
      %p101 = scmp.eq.s32.totalorder %s14, 0
      %p102 = por %p100, %p101
      %p103 = scmp.ne.s32.totalorder %s95, %s97
      %p104 = scmp.eq.s32.totalorder %s19, 1
      %p105 = por %p103, %p104
      %p106 = scmp.ne.s32.totalorder %s97, %s98
      %p107 = scmp.eq.s32.totalorder %s19, 0
      %p108 = por %p106, %p107
      %p109 = scmp.ne.s32.totalorder %s97, %s98
      %p110 = scmp.eq.s32.totalorder %s20, 1
      %p111 = por %p109, %p110
      %p113 = scmp.ne.s32.totalorder %s98, %s112
      %p114 = scmp.eq.s32.totalorder %s20, 0
      %p115 = por %p113, %p114
      %s117 = sadd.s32 %s116, 1
      %p120 = scmp.eq.s32.totalorder %s14, 1
      %p121 = scmp.ne.s32.totalorder %s116, %s118
      %p122 = scmp.eq.s32.totalorder %s14, 0
      %p123 = por %p121, %p122
      %p124 = scmp.ne.s32.totalorder %s116, %s118
      %p125 = scmp.eq.s32.totalorder %s19, 1
      %p126 = por %p124, %p125
      %p127 = scmp.ne.s32.totalorder %s118, %s119
      %p128 = scmp.eq.s32.totalorder %s19, 0
      %p129 = por %p127, %p128
      %p130 = scmp.ne.s32.totalorder %s118, %s119
      %p131 = scmp.eq.s32.totalorder %s20, 1
      %p132 = por %p130, %p131
      %p134 = scmp.ne.s32.totalorder %s119, %s133
      %p135 = scmp.eq.s32.totalorder %s20, 0
      %p136 = por %p134, %p135
      %s138 = sadd.s32 %s137, 1
      %p141 = scmp.eq.s32.totalorder %s14, 1
      %p142 = scmp.ne.s32.totalorder %s137, %s139
      %p143 = scmp.eq.s32.totalorder %s14, 0
      %p144 = por %p142, %p143
      %p145 = scmp.ne.s32.totalorder %s137, %s139
      %p146 = scmp.eq.s32.totalorder %s19, 1
      %p147 = por %p145, %p146
      %p148 = scmp.ne.s32.totalorder %s139, %s140
      %p149 = scmp.eq.s32.totalorder %s19, 0
      %p150 = por %p148, %p149
      %p151 = scmp.ne.s32.totalorder %s139, %s140
      %p152 = scmp.eq.s32.totalorder %s20, 1
      %p153 = por %p151, %p152
      %p155 = scmp.ne.s32.totalorder %s140, %s154
      %p156 = scmp.eq.s32.totalorder %s20, 0
      %p157 = por %p155, %p156
      %p158 = scmp.le.s32.totalorder 1, %s14
      %p159 = scmp.lt.s32.totalorder %s14, 3
      %p160 = pnand %p158, %p159
      %p161 = pneg %p160
      // Predicated region
      $region9: #{siamese_forward.1} parent=5 // pred_check
        _
      $region10: #{siamese_forward.1} parent=5 // pred_check_branch
        %163 = sbr.rel (%p160) target = $region12
      $region11: #{siamese_forward.1} parent=5 // pred_region
        %s164 = ssub.s32 %s14, 1
        // Predicated region
        $region13: #{siamese_forward.1} parent=11 // pred_check
          %p165 = pneg %p87
        $region14: #{siamese_forward.1} parent=11 // pred_check_branch
          %167 = sbr.rel (%p165) target = $region16
        $region15: #{siamese_forward.1} parent=11 // pred_region
          _
        $region16: #{siamese_forward.1} parent=11 // pred_fallthru
          _
        // Predicated region
        $region17: #{siamese_forward.1} parent=11 // pred_check
          %p168 = pneg %p108
        $region18: #{siamese_forward.1} parent=11 // pred_check_branch
          %170 = sbr.rel (%p168) target = $region20
        $region19: #{siamese_forward.1} parent=11 // pred_region
          _
        $region20: #{siamese_forward.1} parent=11 // pred_fallthru
          _
        // Predicated region
        $region21: #{siamese_forward.1} parent=11 // pred_check
          %p171 = pneg %p129
        $region22: #{siamese_forward.1} parent=11 // pred_check_branch
          %173 = sbr.rel (%p171) target = $region24
        $region23: #{siamese_forward.1} parent=11 // pred_region
          _
        $region24: #{siamese_forward.1} parent=11 // pred_fallthru
          _
      $region12: #{siamese_forward.1} parent=5 // pred_fallthru
        _
      %p174 = scmp.lt.s32.totalorder %s14, 2
      // Predicated region
      $region25: #{siamese_forward.1} parent=5 // pred_check
        %p175 = pneg %p174
      $region26: #{siamese_forward.1} parent=5 // pred_check_branch
        %177 = sbr.rel (%p175) target = $region28
      $region27: #{siamese_forward.1} parent=5 // pred_region
        // Predicated region
        $region29: #{siamese_forward.1} parent=27 // pred_check
          %p178 = pneg %p34
        $region30: #{siamese_forward.1} parent=27 // pred_check_branch
          %180 = sbr.rel (%p178) target = $region32
        $region31: #{siamese_forward.1} parent=27 // pred_region
          %s181 = smul.u32 4, %s14
          %p182 = scmp.lt.s32.totalorder %s181, 7
          %s183 = scalar_select %p182, %s181, 7
          %s184 = smul.addr %s183, 8
          %s185 = scalar_lea.vmem %s0, %s184
          %s186 = smul.u32 4, %s14
        $region32: #{siamese_forward.1} parent=27 // pred_fallthru
          _
        // Predicated region
        $region33: #{siamese_forward.1} parent=27 // pred_check
          %p187 = pneg %p60
        $region34: #{siamese_forward.1} parent=27 // pred_check_branch
          %189 = sbr.rel (%p187) target = $region36
        $region35: #{siamese_forward.1} parent=27 // pred_region
          %s190 = sand.u32 %s50, 1
          %s191 = scalar_lea.sflag [#allocation4], %s190
          %s192 = sand.u32 %s50, 1
          %s193 = smul.addr %s192, 512
          %s194 = scalar_lea.vmem [#allocation3], %s193
          %s195 = smul.u32 64, %s14
          %s197 = ssub.s32 8192, 8192
          %198 = vsyncadd %s191, %s197
          %s199 = smul.addr %s195, 128
          %s200 = scalar_lea.hbm %s1, %s199
          %s201 = sshll.u32 %s194, 4
          %s202 = int_to_ptr.vmem [resolvable:$true] %s201
          %207 = dma.hbm_to_vmem [thread:$0]  %s200, 8192, %s202, %s191, 128, 128, 8
        $region36: #{siamese_forward.1} parent=27 // pred_fallthru
          _
      $region28: #{siamese_forward.1} parent=5 // pred_fallthru
        _
      %p208 = scmp.le.s32.totalorder 1, %s14
      %p209 = scmp.lt.s32.totalorder %s14, 3
      %p210 = pnand %p208, %p209
      %p211 = pneg %p210
      // Predicated region
      $region37: #{siamese_forward.1} parent=5 // pred_check
        _
      $region38: #{siamese_forward.1} parent=5 // pred_check_branch
        %213 = sbr.rel (%p210) target = $region40
      $region39: #{siamese_forward.1} parent=5 // pred_region
        %s214 = ssub.s32 %s14, 1
        %s215 = sand.u32 %s53, 1
        %s216 = scalar_lea.sflag [#allocation4], %s215
        %s217 = sand.u32 %s53, 1
        %s218 = smul.addr %s217, 512
        %s219 = scalar_lea.vmem [#allocation3], %s218
        // Predicated region
        $region41: #{siamese_forward.1} parent=39 // pred_check
          %p220 = pneg %p66
        $region42: #{siamese_forward.1} parent=39 // pred_check_branch
          %222 = sbr.rel (%p220) target = $region44
        $region43: #{siamese_forward.1} parent=39 // pred_region
          %223 = dma.done %s216, 8192
        $region44: #{siamese_forward.1} parent=39 // pred_fallthru
          _
        %s224 = smul.u32 4, %s19
        %p225 = scmp.lt.s32.totalorder %s224, 7
        %s226 = scalar_select %p225, %s224, 7
        %s227 = smul.addr %s226, 8
        %s228 = scalar_lea.vmem %s0, %s227
        %p229 = pneg %p40
        %p230 = pneg %p37
        %s231 = sand.u32 %s53, 1
        %s232 = scalar_lea.sflag [#allocation4], %s231
        %s233 = sand.u32 %s53, 1
        %s234 = smul.addr %s233, 512
        %s235 = scalar_lea.vmem [#allocation3], %s234
        %p236 = pneg %p66
        %p237 = pneg %p63
        %p238 = pneg %p87
        %p239 = pneg %p84
        %p240 = pneg %p108
        %p241 = pneg %p105
        %p242 = pneg %p129
        %p243 = pneg %p126
        %p244 = pneg %p150
        %p245 = pneg %p147
        %s246 = smul.u32 4, %s19
        %p247 = scmp.lt.s32.totalorder %s246, 7
        %s248 = scalar_select %p247, %s246, 7
        %s249 = smul.addr %s248, 8
        %s250 = scalar_lea.vmem %s0, %s249
        %s251 = smul.u32 4, %s19
        %s252 = smul.u32 64, %s19
        %p253 = scmp.eq.s32.totalorder %s19, 0
        // Predicated region
        $region45: #{siamese_forward.1} parent=39 // pred_check
          %p254 = pneg %p253
        $region46: #{siamese_forward.1} parent=39 // pred_check_branch
          %256 = sbr.rel (%p254) target = $region48
        $region47: #{siamese_forward.1} parent=39 // pred_region
          %257 = vst [vmem:[#allocation2] sm:$0xff] 0.0
        $region48: #{siamese_forward.1} parent=39 // pred_fallthru
          _
        %v258 = vld [vmem:[#allocation2] sm:$0xff]
        %v259 = vld [vmem:[%s250] sm:$0xff]
        %v260 = vld [vmem:[%s250 + $0x8] sm:$0xff]
        %v261 = vld [vmem:[%s250 + $0x10] sm:$0xff]
        %v262 = vld [vmem:[%s250 + $0x18] sm:$0xff]
        %v263 = vld [vmem:[%s219] sm:$0xff]
        %v264 = vld [vmem:[%s219 + $0x8] sm:$0xff]
        %v265 = vld [vmem:[%s219 + $0x10] sm:$0xff]
        %v266 = vld [vmem:[%s219 + $0x18] sm:$0xff]
        %v267 = vld [vmem:[%s219 + $0x20] sm:$0xff]
        %v268 = vld [vmem:[%s219 + $0x28] sm:$0xff]
        %v269 = vld [vmem:[%s219 + $0x30] sm:$0xff]
        %v270 = vld [vmem:[%s219 + $0x38] sm:$0xff]
        %v271 = vld [vmem:[%s219 + $0x40] sm:$0xff]
        %v272 = vld [vmem:[%s219 + $0x48] sm:$0xff]
        %v273 = vld [vmem:[%s219 + $0x50] sm:$0xff]
        %v274 = vld [vmem:[%s219 + $0x58] sm:$0xff]
        %v275 = vld [vmem:[%s219 + $0x60] sm:$0xff]
        %v276 = vld [vmem:[%s219 + $0x68] sm:$0xff]
        %v277 = vld [vmem:[%s219 + $0x70] sm:$0xff]
        %v278 = vld [vmem:[%s219 + $0x78] sm:$0xff]
        %v279 = vld [vmem:[%s219 + $0x80] sm:$0xff]
        %v280 = vld [vmem:[%s219 + $0x88] sm:$0xff]
        %v281 = vld [vmem:[%s219 + $0x90] sm:$0xff]
        %v282 = vld [vmem:[%s219 + $0x98] sm:$0xff]
        %v283 = vld [vmem:[%s219 + $0xa0] sm:$0xff]
        %v284 = vld [vmem:[%s219 + $0xa8] sm:$0xff]
        %v285 = vld [vmem:[%s219 + $0xb0] sm:$0xff]
        %v286 = vld [vmem:[%s219 + $0xb8] sm:$0xff]
        %v287 = vld [vmem:[%s219 + $0xc0] sm:$0xff]
        %v288 = vld [vmem:[%s219 + $0xc8] sm:$0xff]
        %v289 = vld [vmem:[%s219 + $0xd0] sm:$0xff]
        %v290 = vld [vmem:[%s219 + $0xd8] sm:$0xff]
        %v291 = vld [vmem:[%s219 + $0xe0] sm:$0xff]
        %v292 = vld [vmem:[%s219 + $0xe8] sm:$0xff]
        %v293 = vld [vmem:[%s219 + $0xf0] sm:$0xff]
        %v294 = vld [vmem:[%s219 + $0xf8] sm:$0xff]
        %v295 = vld [vmem:[%s219 + $0x100] sm:$0xff]
        %v296 = vld [vmem:[%s219 + $0x108] sm:$0xff]
        %v297 = vld [vmem:[%s219 + $0x110] sm:$0xff]
        %v298 = vld [vmem:[%s219 + $0x118] sm:$0xff]
        %v299 = vld [vmem:[%s219 + $0x120] sm:$0xff]
        %v300 = vld [vmem:[%s219 + $0x128] sm:$0xff]
        %v301 = vld [vmem:[%s219 + $0x130] sm:$0xff]
        %v302 = vld [vmem:[%s219 + $0x138] sm:$0xff]
        %v303 = vld [vmem:[%s219 + $0x140] sm:$0xff]
        %v304 = vld [vmem:[%s219 + $0x148] sm:$0xff]
        %v305 = vld [vmem:[%s219 + $0x150] sm:$0xff]
        %v306 = vld [vmem:[%s219 + $0x158] sm:$0xff]
        %v307 = vld [vmem:[%s219 + $0x160] sm:$0xff]
        %v308 = vld [vmem:[%s219 + $0x168] sm:$0xff]
        %v309 = vld [vmem:[%s219 + $0x170] sm:$0xff]
        %v310 = vld [vmem:[%s219 + $0x178] sm:$0xff]
        %v311 = vld [vmem:[%s219 + $0x180] sm:$0xff]
        %v312 = vld [vmem:[%s219 + $0x188] sm:$0xff]
        %v313 = vld [vmem:[%s219 + $0x190] sm:$0xff]
        %v314 = vld [vmem:[%s219 + $0x198] sm:$0xff]
        %v315 = vld [vmem:[%s219 + $0x1a0] sm:$0xff]
        %v316 = vld [vmem:[%s219 + $0x1a8] sm:$0xff]
        %v317 = vld [vmem:[%s219 + $0x1b0] sm:$0xff]
        %v318 = vld [vmem:[%s219 + $0x1b8] sm:$0xff]
        %v319 = vld [vmem:[%s219 + $0x1c0] sm:$0xff]
        %v320 = vld [vmem:[%s219 + $0x1c8] sm:$0xff]
        %v321 = vld [vmem:[%s219 + $0x1d0] sm:$0xff]
        %v322 = vld [vmem:[%s219 + $0x1d8] sm:$0xff]
        %v323 = vld [vmem:[%s219 + $0x1e0] sm:$0xff]
        %v324 = vld [vmem:[%s219 + $0x1e8] sm:$0xff]
        %v325 = vld [vmem:[%s219 + $0x1f0] sm:$0xff]
        %v326 = vld [vmem:[%s219 + $0x1f8] sm:$0xff]
        %327 = vmatprep.subr.mxu0 0.0
        %328 = vmatpush1.msra.mxu0 %v263
        %329 = vmatprep.subr.mxu0 0.0
        %330 = vmatpush1.msra.mxu0 %v264
        %331 = vmatprep.subr.mxu0 0.0
        %332 = vmatpush1.msra.mxu0 %v265
        %333 = vmatprep.subr.mxu0 0.0
        %334 = vmatpush1.msra.mxu0 %v266
        %335 = vmatprep.subr.mxu0 0.0
        %336 = vmatpush1.msra.mxu0 %v267
        %337 = vmatprep.subr.mxu0 0.0
        %338 = vmatpush1.msra.mxu0 %v268
        %339 = vmatprep.subr.mxu0 0.0
        %340 = vmatpush1.msra.mxu0 %v269
        %341 = vmatprep.subr.mxu0 0.0
        %342 = vmatpush1.msra.mxu0 %v270
        %343 = vmatprep.subr.mxu0 0.0
        %344 = vmatpush1.msra.mxu0 %v271
        %345 = vmatprep.subr.mxu0 0.0
        %346 = vmatpush1.msra.mxu0 %v272
        %347 = vmatprep.subr.mxu0 0.0
        %348 = vmatpush1.msra.mxu0 %v273
        %349 = vmatprep.subr.mxu0 0.0
        %350 = vmatpush1.msra.mxu0 %v274
        %351 = vmatprep.subr.mxu0 0.0
        %352 = vmatpush1.msra.mxu0 %v275
        %353 = vmatprep.subr.mxu0 0.0
        %354 = vmatpush1.msra.mxu0 %v276
        %355 = vmatprep.subr.mxu0 0.0
        %356 = vmatpush1.msra.mxu0 %v277
        %357 = vmatprep.subr.mxu0 0.0
        %358 = vmatpush1.msra.mxu0 %v278
        %359 = vmatprep.subr.mxu0 0.0
        %360 = vmatpush1.msra.mxu0 %v279
        %361 = vmatprep.subr.mxu0 0.0
        %362 = vmatpush1.msra.mxu0 %v280
        %363 = vmatprep.subr.mxu0 0.0
        %364 = vmatpush1.msra.mxu0 %v281
        %365 = vmatprep.subr.mxu0 0.0
        %366 = vmatpush1.msra.mxu0 %v282
        %367 = vmatprep.subr.mxu0 0.0
        %368 = vmatpush1.msra.mxu0 %v283
        %369 = vmatprep.subr.mxu0 0.0
        %370 = vmatpush1.msra.mxu0 %v284
        %371 = vmatprep.subr.mxu0 0.0
        %372 = vmatpush1.msra.mxu0 %v285
        %373 = vmatprep.subr.mxu0 0.0
        %374 = vmatpush1.msra.mxu0 %v286
        %375 = vmatprep.subr.mxu0 0.0
        %376 = vmatpush1.msra.mxu0 %v287
        %377 = vmatprep.subr.mxu0 0.0
        %378 = vmatpush1.msra.mxu0 %v288
        %379 = vmatprep.subr.mxu0 0.0
        %380 = vmatpush1.msra.mxu0 %v289
        %381 = vmatprep.subr.mxu0 0.0
        %382 = vmatpush1.msra.mxu0 %v290
        %383 = vmatprep.subr.mxu0 0.0
        %384 = vmatpush1.msra.mxu0 %v291
        %385 = vmatprep.subr.mxu0 0.0
        %386 = vmatpush1.msra.mxu0 %v292
        %387 = vmatprep.subr.mxu0 0.0
        %388 = vmatpush1.msra.mxu0 %v293
        %389 = vmatprep.subr.mxu0 0.0
        %390 = vmatpush1.msra.mxu0 %v294
        %391 = vmatprep.mubr.f32.mxu0 %v260
        %392 = vmatmul.mubr.f32.gmra.mrb[0].mxu0 %v259
        %v393 = vpop.f32.mrb[0].mxu0
        %v394 = vadd.f32 0.0, %v393
        %v395 = vpop.f32.mrb[0].mxu0
        %396 = vdwg.mxu0
        %397 = vmatprep.subr.mxu0 0.0
        %398 = vmatpush1.msra.mxu0 %v295
        %399 = vmatprep.subr.mxu0 0.0
        %400 = vmatpush1.msra.mxu0 %v296
        %401 = vmatprep.subr.mxu0 0.0
        %402 = vmatpush1.msra.mxu0 %v297
        %403 = vmatprep.subr.mxu0 0.0
        %404 = vmatpush1.msra.mxu0 %v298
        %405 = vmatprep.subr.mxu0 0.0
        %406 = vmatpush1.msra.mxu0 %v299
        %407 = vmatprep.subr.mxu0 0.0
        %408 = vmatpush1.msra.mxu0 %v300
        %409 = vmatprep.subr.mxu0 0.0
        %410 = vmatpush1.msra.mxu0 %v301
        %411 = vmatprep.subr.mxu0 0.0
        %412 = vmatpush1.msra.mxu0 %v302
        %413 = vmatprep.subr.mxu0 0.0
        %414 = vmatpush1.msra.mxu0 %v303
        %415 = vmatprep.subr.mxu0 0.0
        %416 = vmatpush1.msra.mxu0 %v304
        %417 = vmatprep.subr.mxu0 0.0
        %418 = vmatpush1.msra.mxu0 %v305
        %419 = vmatprep.subr.mxu0 0.0
        %420 = vmatpush1.msra.mxu0 %v306
        %421 = vmatprep.subr.mxu0 0.0
        %422 = vmatpush1.msra.mxu0 %v307
        %423 = vmatprep.subr.mxu0 0.0
        %424 = vmatpush1.msra.mxu0 %v308
        %425 = vmatprep.subr.mxu0 0.0
        %426 = vmatpush1.msra.mxu0 %v309
        %427 = vmatprep.subr.mxu0 0.0
        %428 = vmatpush1.msra.mxu0 %v310
        %429 = vmatprep.subr.mxu0 0.0
        %430 = vmatpush1.msra.mxu0 %v311
        %431 = vmatprep.subr.mxu0 0.0
        %432 = vmatpush1.msra.mxu0 %v312
        %433 = vmatprep.subr.mxu0 0.0
        %434 = vmatpush1.msra.mxu0 %v313
        %435 = vmatprep.subr.mxu0 0.0
        %436 = vmatpush1.msra.mxu0 %v314
        %437 = vmatprep.subr.mxu0 0.0
        %438 = vmatpush1.msra.mxu0 %v315
        %439 = vmatprep.subr.mxu0 0.0
        %440 = vmatpush1.msra.mxu0 %v316
        %441 = vmatprep.subr.mxu0 0.0
        %442 = vmatpush1.msra.mxu0 %v317
        %443 = vmatprep.subr.mxu0 0.0
        %444 = vmatpush1.msra.mxu0 %v318
        %445 = vmatprep.subr.mxu0 0.0
        %446 = vmatpush1.msra.mxu0 %v319
        %447 = vmatprep.subr.mxu0 0.0
        %448 = vmatpush1.msra.mxu0 %v320
        %449 = vmatprep.subr.mxu0 0.0
        %450 = vmatpush1.msra.mxu0 %v321
        %451 = vmatprep.subr.mxu0 0.0
        %452 = vmatpush1.msra.mxu0 %v322
        %453 = vmatprep.subr.mxu0 0.0
        %454 = vmatpush1.msra.mxu0 %v323
        %455 = vmatprep.subr.mxu0 0.0
        %456 = vmatpush1.msra.mxu0 %v324
        %457 = vmatprep.subr.mxu0 0.0
        %458 = vmatpush1.msra.mxu0 %v325
        %459 = vmatprep.subr.mxu0 0.0
        %460 = vmatpush1.msra.mxu0 %v326
        %461 = vmatprep.mubr.f32.mxu0 %v262
        %462 = vmatmul.mubr.f32.gmra.mrb[0].mxu0 %v261
        %v463 = vpop.f32.mrb[0].mxu0
        %v464 = vadd.f32 %v394, %v463
        %v465 = vpop.f32.mrb[0].mxu0
        %466 = vdwg.mxu0
        %v467 = vadd.f32 %v258, %v464
        %468 = vst [vmem:[#allocation2] sm:$0xff] %v467
        %p469 = scmp.eq.s32.totalorder %s19, 1
        // Predicated region
        $region49: #{siamese_forward.1} parent=39 // pred_check
          %p470 = pneg %p469
        $region50: #{siamese_forward.1} parent=39 // pred_check_branch
          %472 = sbr.rel (%p470) target = $region52
        $region51: #{siamese_forward.1} parent=39 // pred_region
          %v473 = vld [vmem:[#allocation2] sm:$0xff]
          %v474 = vld [vmem:[%s2] sm:$0x1]
          %v476 = vlaneseq
          %v477 = vshrl.u32 %v476, 7
          %v478 = vsub.s32 0, %v477
          %v479 = vrot.slane %v474, %v478
          %v481 = vadd.f32 %v473, %v479
          %v482 = vmax.f32 %v481, 0.0
          %v483 = vld [vmem:[%s3] sm:$0xff]
          %v484 = vld [vmem:[%s3 + $0x8] sm:$0xff]
          %v485 = vld [vmem:[%s3 + $0x10] sm:$0xff]
          %v486 = vld [vmem:[%s3 + $0x18] sm:$0xff]
          %v487 = vld [vmem:[%s3 + $0x20] sm:$0xff]
          %v488 = vld [vmem:[%s3 + $0x28] sm:$0xff]
          %v489 = vld [vmem:[%s3 + $0x30] sm:$0xff]
          %v490 = vld [vmem:[%s3 + $0x38] sm:$0xff]
          %v491 = vld [vmem:[%s3 + $0x40] sm:$0xff]
          %v492 = vld [vmem:[%s3 + $0x48] sm:$0xff]
          %v493 = vld [vmem:[%s3 + $0x50] sm:$0xff]
          %v494 = vld [vmem:[%s3 + $0x58] sm:$0xff]
          %v495 = vld [vmem:[%s3 + $0x60] sm:$0xff]
          %v496 = vld [vmem:[%s3 + $0x68] sm:$0xff]
          %v497 = vld [vmem:[%s3 + $0x70] sm:$0xff]
          %v498 = vld [vmem:[%s3 + $0x78] sm:$0xff]
          %v499 = vld [vmem:[%s4] sm:$0x1]
          %v501 = vlaneseq
          %v502 = vshrl.u32 %v501, 7
          %v503 = vsub.s32 0, %v502
          %v504 = vrot.slane %v499, %v503
          %506 = vmatprep.subr.mxu0 0.0
          %507 = vmatpush1.msra.mxu0 %v483
          %508 = vmatprep.subr.mxu0 0.0
          %509 = vmatpush1.msra.mxu0 %v484
          %510 = vmatprep.subr.mxu0 0.0
          %511 = vmatpush1.msra.mxu0 %v485
          %512 = vmatprep.subr.mxu0 0.0
          %513 = vmatpush1.msra.mxu0 %v486
          %514 = vmatprep.subr.mxu0 0.0
          %515 = vmatpush1.msra.mxu0 %v487
          %516 = vmatprep.subr.mxu0 0.0
          %517 = vmatpush1.msra.mxu0 %v488
          %518 = vmatprep.subr.mxu0 0.0
          %519 = vmatpush1.msra.mxu0 %v489
          %520 = vmatprep.subr.mxu0 0.0
          %521 = vmatpush1.msra.mxu0 %v490
          %522 = vmatprep.subr.mxu0 0.0
          %523 = vmatpush1.msra.mxu0 %v491
          %524 = vmatprep.subr.mxu0 0.0
          %525 = vmatpush1.msra.mxu0 %v492
          %526 = vmatprep.subr.mxu0 0.0
          %527 = vmatpush1.msra.mxu0 %v493
          %528 = vmatprep.subr.mxu0 0.0
          %529 = vmatpush1.msra.mxu0 %v494
          %530 = vmatprep.subr.mxu0 0.0
          %531 = vmatpush1.msra.mxu0 %v495
          %532 = vmatprep.subr.mxu0 0.0
          %533 = vmatpush1.msra.mxu0 %v496
          %534 = vmatprep.subr.mxu0 0.0
          %535 = vmatpush1.msra.mxu0 %v497
          %536 = vmatprep.subr.mxu0 0.0
          %537 = vmatpush1.msra.mxu0 %v498
          %538 = vmatprep.subr.mxu0 0.0
          %539 = vmatpush1.msra.mxu0 0.0
          %540 = vmatprep.subr.mxu0 0.0
          %541 = vmatpush1.msra.mxu0 0.0
          %542 = vmatprep.subr.mxu0 0.0
          %543 = vmatpush1.msra.mxu0 0.0
          %544 = vmatprep.subr.mxu0 0.0
          %545 = vmatpush1.msra.mxu0 0.0
          %546 = vmatprep.subr.mxu0 0.0
          %547 = vmatpush1.msra.mxu0 0.0
          %548 = vmatprep.subr.mxu0 0.0
          %549 = vmatpush1.msra.mxu0 0.0
          %550 = vmatprep.subr.mxu0 0.0
          %551 = vmatpush1.msra.mxu0 0.0
          %552 = vmatprep.subr.mxu0 0.0
          %553 = vmatpush1.msra.mxu0 0.0
          %554 = vmatprep.subr.mxu0 0.0
          %555 = vmatpush1.msra.mxu0 0.0
          %556 = vmatprep.subr.mxu0 0.0
          %557 = vmatpush1.msra.mxu0 0.0
          %558 = vmatprep.subr.mxu0 0.0
          %559 = vmatpush1.msra.mxu0 0.0
          %560 = vmatprep.subr.mxu0 0.0
          %561 = vmatpush1.msra.mxu0 0.0
          %562 = vmatprep.subr.mxu0 0.0
          %563 = vmatpush1.msra.mxu0 0.0
          %564 = vmatprep.subr.mxu0 0.0
          %565 = vmatpush1.msra.mxu0 0.0
          %566 = vmatprep.subr.mxu0 0.0
          %567 = vmatpush1.msra.mxu0 0.0
          %568 = vmatprep.subr.mxu0 0.0
          %569 = vmatpush1.msra.mxu0 0.0
          %570 = vmatprep.mubr.f32.mxu0 0.0
          %571 = vmatmul.mubr.f32.gmra.mrb[0].mxu0 %v482
          %v572 = vpop.f32.mrb[0].mxu0
          %v573 = vadd.f32 %v504, %v572
          %v574 = vpop.f32.mrb[0].mxu0
          %575 = vdwg.mxu0
          %576 = vst [vmem:[%s5] sm:$0xff] %v573
        $region52: #{siamese_forward.1} parent=39 // pred_fallthru
          _
        // Predicated region
        $region53: #{siamese_forward.1} parent=39 // pred_check
          %p577 = pneg %p147
        $region54: #{siamese_forward.1} parent=39 // pred_check_branch
          %579 = sbr.rel (%p577) target = $region56
        $region55: #{siamese_forward.1} parent=39 // pred_region
          _
        $region56: #{siamese_forward.1} parent=39 // pred_fallthru
          _
        // Predicated region
        $region57: #{siamese_forward.1} parent=39 // pred_check
          %p580 = pneg %p147
        $region58: #{siamese_forward.1} parent=39 // pred_check_branch
          %582 = sbr.rel (%p580) target = $region60
        $region59: #{siamese_forward.1} parent=39 // pred_region
          _
        $region60: #{siamese_forward.1} parent=39 // pred_fallthru
          _
      $region40: #{siamese_forward.1} parent=5 // pred_fallthru
        _
      %p583 = scmp.le.s32.totalorder 2, %s14
      // Predicated region
      $region61: #{siamese_forward.1} parent=5 // pred_check
        %p584 = pneg %p583
      $region62: #{siamese_forward.1} parent=5 // pred_check_branch
        %586 = sbr.rel (%p584) target = $region64
      $region63: #{siamese_forward.1} parent=5 // pred_region
        %s587 = ssub.s32 %s14, 2
      $region64: #{siamese_forward.1} parent=5 // pred_fallthru
        _
    $region6: #{siamese_forward.1} parent=1 // loop_footer
      %s18 = sadd.s32 1, %s14
    $region7: #{siamese_forward.1} parent=1 // loop_footer_branch
      %13 = sbr.rel target = $region3
    $region8: #{siamese_forward.1} parent=1 // loop_exit
      _
    %588 = vsyncpa [#allocation4], 1
    %s589 = scalar_lea.sflag [#allocation4], 1
    %590 = vsyncpa %s589, 1

</llo_original>
